<compile_context>
chip_gen: v7x
topology: tpu7x:2x2x1
jax: 0.10.0
libtpu: 0.0.40
codegen_flags: <defaults>
</compile_context>

<pallas_src>
import functools

import numpy as np
import jax
import jax.numpy as jnp
from jax.experimental import pallas as pl
from jax.experimental.pallas import tpu as pltpu

_LANE = 128


def _round_up(x, m):
    return ((x + m - 1) // m) * m


def _mlp_kernel(x_ref, w_ref, b_ref, o_ref, *, out_dim):
    # x_ref: [D, tile_b]  w_ref: [3, D, D]  b_ref: [3, D, 1]  o_ref: [out_dim, tile_b]
    act = x_ref[...]
    for k in range(3):  # static unroll: three fused Linear + ReLU layers
        h = jnp.dot(w_ref[k], act, preferred_element_type=jnp.float32)
        act = jnp.maximum(h + b_ref[k], 0.0)          # (D,1) bias broadcasts over lanes
    o_ref[...] = act[:out_dim, :].astype(o_ref.dtype)  # only the real output rows


def _mlp_ref(x, w1, b1, w2, b2, w3, b3):
    h = jnp.maximum(x @ w1.T + b1, 0.0)
    h = jnp.maximum(h @ w2.T + b2, 0.0)
    return jnp.maximum(h @ w3.T + b3, 0.0)


def mlp_forward(x, w1, b1, w2, b2, w3, b3, *, tile_b=2048, use_pallas=None):
    """x: [B, in_features]; weights PyTorch-native [out, in]; biases [out]."""
    B, in_f = x.shape
    h1d, h2d, out_d = w1.shape[0], w2.shape[0], w3.shape[0]

    if use_pallas is None:
        # For tiny batches the pallas_call launch / pipeline prologue dominates;
        # let XLA's fused path handle it.
        use_pallas = B >= 512
    if not use_pallas:
        return _mlp_ref(x, w1, b1, w2, b2, w3, b3)

    # Common padded feature dim (sublane axis): multiple of 8.  Here D = 16.
    D = _round_up(max(in_f, h1d, h2d, out_d), 8)

    def pad_w(w):
        o, i = w.shape
        return jnp.pad(w, ((0, D - o), (0, D - i)))

    def pad_b(b):
        return jnp.pad(b.reshape(-1, 1), ((0, D - b.shape[0]), (0, 0)))

    w_packed = jnp.stack([pad_w(w1), pad_w(w2), pad_w(w3)])   # (3, D, D)
    b_packed = jnp.stack([pad_b(b1), pad_b(b2), pad_b(b3)])   # (3, D, 1)

    # Batch tiling: batch lives on the lane axis -> tiles are multiples of 128.
    B128 = _round_up(B, _LANE)
    tile = max(_LANE, min(tile_b, B128))
    tile = (tile // _LANE) * _LANE
    if B128 >= 2 * _LANE:
        # Keep >= 2 grid steps so v7x's second TensorCore participates,
        # without increasing padding beyond the 128-lane granule much.
        tile = min(tile, max(_LANE, (B128 // 2) // _LANE * _LANE))
    grid_b = pl.cdiv(B128, tile)
    B_pad = grid_b * tile

    # Feature-major input [D, B_pad]; zero padding is exact (0 * W = 0).
    x_t = jnp.pad(x.T, ((0, D - in_f), (0, B_pad - B)))

    const_kw = dict(pipeline_mode=pl.Buffered(1))  # fetched once, single-buffered
    kernel = functools.partial(_mlp_kernel, out_dim=out_d)

    # VMEM/step: 2*D*tile*4B (x) + 2*out_d*tile*4B (out) + ~3 KiB weights —
    # well under every generation's scoped VMEM limit, no override needed.
    y_fm = pl.pallas_call(
        kernel,
        out_shape=jax.ShapeDtypeStruct((out_d, B_pad), jnp.float32),
        grid=(grid_b,),
        in_specs=[
            pl.BlockSpec((D, tile), lambda i: (0, i)),                      # activations
            pl.BlockSpec(w_packed.shape, lambda i: (0, 0, 0), **const_kw),  # packed weights
            pl.BlockSpec(b_packed.shape, lambda i: (0, 0, 0), **const_kw),  # packed biases
        ],
        out_specs=pl.BlockSpec((out_d, tile), lambda i: (0, i)),
        compiler_params=pltpu.CompilerParams(
            dimension_semantics=("parallel",)),  # v7x: shard batch tiles over 2 TCs
    )(x_t, w_packed, b_packed)

    return y_fm[:, :B].T


def init_linear(key, fan_in, fan_out):
    """Mimics nn.Linear default init; returns PyTorch-native W [out, in], b [out]."""
    kw, kb = jax.random.split(key)
    bound = 1.0 / (fan_in ** 0.5)
    w = jax.random.uniform(kw, (fan_out, fan_in), jnp.float32, -bound, bound)
    b = jax.random.uniform(kb, (fan_out,), jnp.float32, -bound, bound)
    return w, b


def _ref_np(x, w1, b1, w2, b2, w3, b3):
    """float64 numpy reference (independent of TPU matmul precision modes)."""
    x = np.asarray(x, np.float64)
    ws = [np.asarray(w, np.float64) for w in (w1, w2, w3)]
    bs = [np.asarray(b, np.float64) for b in (b1, b2, b3)]
    h = x
    for w, b in zip(ws, bs):
        h = np.maximum(h @ w.T + b, 0.0)
    return h


if __name__ == "__main__":
    key = jax.random.PRNGKey(0)
    k_x, k1, k2, k3 = jax.random.split(key, 4)

    in_features, h1, h2, out = 4, 8, 9, 3

    w1, b1 = init_linear(k1, in_features, h1)
    w2, b2 = init_linear(k2, h1, h2)
    w3, b3 = init_linear(k3, h2, out)

    # Small batch (single grid step).
    x = jax.random.normal(k_x, (8, in_features), jnp.float32)
    y = jax.block_until_ready(
        mlp_forward(x, w1, b1, w2, b2, w3, b3, use_pallas=True))
    assert y.shape == (8, out)
    # Tolerance allows for MXU bf16-pass rounding of f32 matmuls on older gens.
    np.testing.assert_allclose(np.asarray(y), _ref_np(x, w1, b1, w2, b2, w3, b3),
                               rtol=5e-3, atol=5e-3)

    # Non-multiple-of-128 batch: exercises padding + multi-step grid (2 TCs on v7x).
    xb = jax.random.normal(jax.random.PRNGKey(7), (300, in_features), jnp.float32)
    yb = jax.block_until_ready(
        mlp_forward(xb, w1, b1, w2, b2, w3, b3, use_pallas=True))
    assert yb.shape == (300, out)
    np.testing.assert_allclose(np.asarray(yb), _ref_np(xb, w1, b1, w2, b2, w3, b3),
                               rtol=5e-3, atol=5e-3)

    print("KERNEL_OK")
</pallas_src>

<mosaic_0001>
module attributes {stable_mosaic.version = 11 : i64} {
  func.func @_mlp_kernel(%arg0: i32, %arg1: memref<16x128xf32, #tpu.memory_space<vmem>>, %arg2: memref<3x16x16xf32, #tpu.memory_space<vmem>>, %arg3: memref<3x16x1xf32, #tpu.memory_space<vmem>>, %arg4: memref<3x128xf32, #tpu.memory_space<vmem>>) attributes {dimension_semantics = [#tpu.dimension_semantics<parallel>], iteration_bounds = array<i64: 1>, scalar_prefetch = 0 : i64, scratch_operands = 0 : i64, tpu.core_type = #tpu.core_type<tc>, window_params = [{transform_indices = @transform_0, window_bounds = array<i64: 16, 128>}, {pipeline_mode = #tpu.pipeline_mode<synchronous>, transform_indices = @transform_1, window_bounds = array<i64: 3, 16, 16>}, {pipeline_mode = #tpu.pipeline_mode<synchronous>, transform_indices = @transform_2, window_bounds = array<i64: 3, 16, 1>}, {transform_indices = @transform_3, window_bounds = array<i64: 3, 128>}]} {
    %c0 = arith.constant 0 : index
    %c0_0 = arith.constant 0 : index
    %0 = vector.load %arg1[%c0, %c0_0] : memref<16x128xf32, #tpu.memory_space<vmem>>, vector<16x128xf32>
    %c0_1 = arith.constant 0 : index
    %c0_2 = arith.constant 0 : index
    %c0_3 = arith.constant 0 : index
    %1 = vector.load %arg2[%c0_1, %c0_2, %c0_3] : memref<3x16x16xf32, #tpu.memory_space<vmem>>, vector<1x16x16xf32>
    %2 = vector.shape_cast %1 : vector<1x16x16xf32> to vector<16x16xf32>
    %cst = arith.constant dense<0.000000e+00> : vector<16x128xf32>
    %3 = tpu.matmul %2, %0, %cst {dimension_numbers = #tpu.dot_dimension_numbers<[1], [0], [0], [1], [0, 0, 1, 1], [], []>} : vector<16x16xf32>, vector<16x128xf32>, vector<16x128xf32> -> vector<16x128xf32>
    %c0_4 = arith.constant 0 : index
    %c0_5 = arith.constant 0 : index
    %c0_6 = arith.constant 0 : index
    %4 = vector.load %arg3[%c0_4, %c0_5, %c0_6] : memref<3x16x1xf32, #tpu.memory_space<vmem>>, vector<1x16x1xf32>
    %5 = vector.shape_cast %4 : vector<1x16x1xf32> to vector<16x1xf32>
    %6 = vector.broadcast %5 : vector<16x1xf32> to vector<16x128xf32>
    %7 = arith.addf %3, %6 : vector<16x128xf32>
    %cst_7 = arith.constant 0.000000e+00 : f32
    %8 = vector.broadcast %cst_7 : f32 to vector<16x128xf32>
    %9 = arith.maximumf %7, %8 : vector<16x128xf32>
    %c1 = arith.constant 1 : index
    %c0_8 = arith.constant 0 : index
    %c0_9 = arith.constant 0 : index
    %10 = vector.load %arg2[%c1, %c0_8, %c0_9] : memref<3x16x16xf32, #tpu.memory_space<vmem>>, vector<1x16x16xf32>
    %11 = vector.shape_cast %10 : vector<1x16x16xf32> to vector<16x16xf32>
    %cst_10 = arith.constant dense<0.000000e+00> : vector<16x128xf32>
    %12 = tpu.matmul %11, %9, %cst_10 {dimension_numbers = #tpu.dot_dimension_numbers<[1], [0], [0], [1], [0, 0, 1, 1], [], []>} : vector<16x16xf32>, vector<16x128xf32>, vector<16x128xf32> -> vector<16x128xf32>
    %c1_11 = arith.constant 1 : index
    %c0_12 = arith.constant 0 : index
    %c0_13 = arith.constant 0 : index
    %13 = vector.load %arg3[%c1_11, %c0_12, %c0_13] : memref<3x16x1xf32, #tpu.memory_space<vmem>>, vector<1x16x1xf32>
    %14 = vector.shape_cast %13 : vector<1x16x1xf32> to vector<16x1xf32>
    %15 = vector.broadcast %14 : vector<16x1xf32> to vector<16x128xf32>
    %16 = arith.addf %12, %15 : vector<16x128xf32>
    %cst_14 = arith.constant 0.000000e+00 : f32
    %17 = vector.broadcast %cst_14 : f32 to vector<16x128xf32>
    %18 = arith.maximumf %16, %17 : vector<16x128xf32>
    %c2 = arith.constant 2 : index
    %c0_15 = arith.constant 0 : index
    %c0_16 = arith.constant 0 : index
    %19 = vector.load %arg2[%c2, %c0_15, %c0_16] : memref<3x16x16xf32, #tpu.memory_space<vmem>>, vector<1x16x16xf32>
    %20 = vector.shape_cast %19 : vector<1x16x16xf32> to vector<16x16xf32>
    %cst_17 = arith.constant dense<0.000000e+00> : vector<16x128xf32>
    %21 = tpu.matmul %20, %18, %cst_17 {dimension_numbers = #tpu.dot_dimension_numbers<[1], [0], [0], [1], [0, 0, 1, 1], [], []>} : vector<16x16xf32>, vector<16x128xf32>, vector<16x128xf32> -> vector<16x128xf32>
    %c2_18 = arith.constant 2 : index
    %c0_19 = arith.constant 0 : index
    %c0_20 = arith.constant 0 : index
    %22 = vector.load %arg3[%c2_18, %c0_19, %c0_20] : memref<3x16x1xf32, #tpu.memory_space<vmem>>, vector<1x16x1xf32>
    %23 = vector.shape_cast %22 : vector<1x16x1xf32> to vector<16x1xf32>
    %24 = vector.broadcast %23 : vector<16x1xf32> to vector<16x128xf32>
    %25 = arith.addf %21, %24 : vector<16x128xf32>
    %cst_21 = arith.constant 0.000000e+00 : f32
    %26 = vector.broadcast %cst_21 : f32 to vector<16x128xf32>
    %27 = arith.maximumf %25, %26 : vector<16x128xf32>
    %28 = vector.extract_strided_slice %27 {offsets = [0, 0], sizes = [3, 128], strides = [1, 1]} : vector<16x128xf32> to vector<3x128xf32>
    %c0_22 = arith.constant 0 : index
    %c0_23 = arith.constant 0 : index
    %29 = vector.load %arg4[%c0_22, %c0_23] : memref<3x128xf32, #tpu.memory_space<vmem>>, vector<3x128xf32>
    tpu.vector_store %arg4[%c0_22, %c0_23], %28 {strides = array<i32>} : memref<3x128xf32, #tpu.memory_space<vmem>>, vector<3x128xf32>,
    return
  }
  func.func @transform_0(%arg0: i32) -> (i32, i32) {
    %c0_i32 = arith.constant 0 : i32
    %c0_i32_0 = arith.constant 0 : i32
    return %c0_i32, %arg0 : i32, i32
  }
  func.func @transform_1(%arg0: i32) -> (i32, i32, i32) {
    %c0_i32 = arith.constant 0 : i32
    %c0_i32_0 = arith.constant 0 : i32
    %c0_i32_1 = arith.constant 0 : i32
    %c0_i32_2 = arith.constant 0 : i32
    return %c0_i32, %c0_i32_0, %c0_i32_1 : i32, i32, i32
  }
  func.func @transform_2(%arg0: i32) -> (i32, i32, i32) {
    %c0_i32 = arith.constant 0 : i32
    %c0_i32_0 = arith.constant 0 : i32
    %c0_i32_1 = arith.constant 0 : i32
    %c0_i32_2 = arith.constant 0 : i32
    return %c0_i32, %c0_i32_0, %c0_i32_1 : i32, i32, i32
  }
  func.func @transform_3(%arg0: i32) -> (i32, i32) {
    %c0_i32 = arith.constant 0 : i32
    %c0_i32_0 = arith.constant 0 : i32
    return %c0_i32, %arg0 : i32, i32
  }
}

</mosaic_0001>

<llo_original>
// kernel: tpu_custom_call.1
$region0: #{tpu_custom_call.1}
  #allocation0 [shape = 'u32[]', space=smem, size = 0x4, offset = 0x4, fixed_abs, tag = 'smem constant byte address 0x4 - core index']
  #allocation1 [shape = 'u32[144,128]{1,0:T(1,128)}', space=vmem, size = 0x12000, scoped, tag = 'internal scratch']
  %s0 = inlined_call_operand.hbm [shape: f32[16,128], index: 0, kind: input, shape index: {}]
  %s1 = inlined_call_operand.vmem [shape: f32[3,16,16], index: 1, kind: input, shape index: {}]
  %s2 = inlined_call_operand.vmem [shape: f32[3,16,1], index: 2, kind: input, shape index: {}]
  %s3 = inlined_call_operand.hbm [shape: f32[3,128], index: 3, kind: output, shape index: {}]
  %s4 = sld [smem:[#allocation0]]
  $region26: #{tpu_custom_call.1} parent=0
    _
  %s6 = ssub.s32 1, %s4
  %s7 = scalar_select 0, %s6, %s4
  $region1: #{tpu_custom_call.1} parent=0
    #allocation2 [shape = 'u8[8192]{0}', space=vmem, size = 0x2000, scoped, tag = 'input window, operand 0, single buffered']
    #allocation3 [shape = 's32[1]{0}', space=sflag, size = 0x4, scoped, tag = 'scoped memory for tpu_custom_call.1']
    #allocation4 [shape = 's32[1]{0}', space=sflag, size = 0x4, scoped, tag = 'scoped memory for tpu_custom_call.1']
    #allocation5 [shape = 'u8[2048]{0}', space=vmem, size = 0x800, scoped, tag = 'output window, operand 0, single buffered']
    %8 = vsyncpa [#allocation3], 0
    %9 = vsyncpa [#allocation4], 0
    // Predicated region
    $region2: #{tpu_custom_call.1} parent=1 // pred_check
      _
    $region3: #{tpu_custom_call.1} parent=1 // pred_check_branch
      %11 = sbr.rel (0) target = $region5
    $region4: #{tpu_custom_call.1} parent=1 // pred_region
      %s13 = ssub.s32 256, 256
      %14 = vsyncadd [#allocation3], %s13
      %s15 = sshll.u32 [#allocation2], 4
      %s16 = int_to_ptr.vmem [resolvable:$true] %s15
      %21 = dma.hbm_to_vmem [thread:$0]  %s0, 256, %s16, [#allocation3], 128, 128, 8
    $region5: #{tpu_custom_call.1} parent=1 // pred_fallthru
      _
    // Predicated region
    $region6: #{tpu_custom_call.1} parent=1 // pred_check
      _
    $region7: #{tpu_custom_call.1} parent=1 // pred_check_branch
      %23 = sbr.rel (0) target = $region9
    $region8: #{tpu_custom_call.1} parent=1 // pred_region
      _
    $region9: #{tpu_custom_call.1} parent=1 // pred_fallthru
      _
    // Predicated region
    $region10: #{tpu_custom_call.1} parent=1 // pred_check
      _
    $region11: #{tpu_custom_call.1} parent=1 // pred_check_branch
      %25 = sbr.rel (0) target = $region13
    $region12: #{tpu_custom_call.1} parent=1 // pred_region
      _
    $region13: #{tpu_custom_call.1} parent=1 // pred_fallthru
      _
    // Predicated region
    $region14: #{tpu_custom_call.1} parent=1 // pred_check
      _
    $region15: #{tpu_custom_call.1} parent=1 // pred_check_branch
      %27 = sbr.rel (0) target = $region17
    $region16: #{tpu_custom_call.1} parent=1 // pred_region
      %28 = dma.done [#allocation3], 256
    $region17: #{tpu_custom_call.1} parent=1 // pred_fallthru
      _
    %v29 = vld [vmem:[#allocation2] sm:$0xff]
    %v30 = vld [vmem:[#allocation2 + $0x8] sm:$0xff]
    %v31 = vld [vmem:[%s1] sm:$0xff]
    %v32 = vld [vmem:[%s1 + $0x8] sm:$0xff]
    %v33 = vld [vmem:[%s2] sm:$0xff]
    %v34 = vld [vmem:[%s2 + $0x8] sm:$0xff]
    %36 = vset.pattern.permute.xlu0 0
    %37 = vperm.xlu0 %36, %v33
    %v38 = vpop.permute.xlu0 %37
    %41 = vset.pattern.permute.xlu0 0
    %42 = vperm.xlu0 %41, %v34
    %v43 = vpop.permute.xlu0 %42
    %vm45 = vcmask 130048
    %v47 = vsel %vm45, %v31, 0
    %v50 = vsel %vm45, %v32, 0
    %52 = vmatprep.subr.mxu0 0.0
    %53 = vmatpush1.msra.mxu0 %v29
    %54 = vmatprep.subr.mxu0 0.0
    %55 = vmatpush1.msra.mxu0 %v30
    %56 = vmatprep.subr.mxu0 0.0
    %57 = vmatpush1.msra.mxu0 0.0
    %58 = vmatprep.subr.mxu0 0.0
    %59 = vmatpush1.msra.mxu0 0.0
    %60 = vmatprep.subr.mxu0 0.0
    %61 = vmatpush1.msra.mxu0 0.0
    %62 = vmatprep.subr.mxu0 0.0
    %63 = vmatpush1.msra.mxu0 0.0
    %64 = vmatprep.subr.mxu0 0.0
    %65 = vmatpush1.msra.mxu0 0.0
    %66 = vmatprep.subr.mxu0 0.0
    %67 = vmatpush1.msra.mxu0 0.0
    %68 = vmatprep.subr.mxu0 0.0
    %69 = vmatpush1.msra.mxu0 0.0
    %70 = vmatprep.subr.mxu0 0.0
    %71 = vmatpush1.msra.mxu0 0.0
    %72 = vmatprep.subr.mxu0 0.0
    %73 = vmatpush1.msra.mxu0 0.0
    %74 = vmatprep.subr.mxu0 0.0
    %75 = vmatpush1.msra.mxu0 0.0
    %76 = vmatprep.subr.mxu0 0.0
    %77 = vmatpush1.msra.mxu0 0.0
    %78 = vmatprep.subr.mxu0 0.0
    %79 = vmatpush1.msra.mxu0 0.0
    %80 = vmatprep.subr.mxu0 0.0
    %81 = vmatpush1.msra.mxu0 0.0
    %82 = vmatprep.subr.mxu0 0.0
    %83 = vmatpush1.msra.mxu0 0.0
    %84 = vmatprep.subr.mxu0 0.0
    %85 = vmatpush1.msra.mxu0 0.0
    %86 = vmatprep.subr.mxu0 0.0
    %87 = vmatpush1.msra.mxu0 0.0
    %88 = vmatprep.subr.mxu0 0.0
    %89 = vmatpush1.msra.mxu0 0.0
    %90 = vmatprep.subr.mxu0 0.0
    %91 = vmatpush1.msra.mxu0 0.0
    %92 = vmatprep.subr.mxu0 0.0
    %93 = vmatpush1.msra.mxu0 0.0
    %94 = vmatprep.subr.mxu0 0.0
    %95 = vmatpush1.msra.mxu0 0.0
    %96 = vmatprep.subr.mxu0 0.0
    %97 = vmatpush1.msra.mxu0 0.0
    %98 = vmatprep.subr.mxu0 0.0
    %99 = vmatpush1.msra.mxu0 0.0
    %100 = vmatprep.subr.mxu0 0.0
    %101 = vmatpush1.msra.mxu0 0.0
    %102 = vmatprep.subr.mxu0 0.0
    %103 = vmatpush1.msra.mxu0 0.0
    %104 = vmatprep.subr.mxu0 0.0
    %105 = vmatpush1.msra.mxu0 0.0
    %106 = vmatprep.subr.mxu0 0.0
    %107 = vmatpush1.msra.mxu0 0.0
    %108 = vmatprep.subr.mxu0 0.0
    %109 = vmatpush1.msra.mxu0 0.0
    %110 = vmatprep.subr.mxu0 0.0
    %111 = vmatpush1.msra.mxu0 0.0
    %112 = vmatprep.subr.mxu0 0.0
    %113 = vmatpush1.msra.mxu0 0.0
    %114 = vmatprep.subr.mxu0 0.0
    %115 = vmatpush1.msra.mxu0 0.0
    %116 = vmatprep.mubr.f32.mxu0 0.0
    %117 = vmatmul.mubr.f32.gmra.mrb[0].mxu0 %v47
    %v118 = vpop.f32.mrb[0].mxu0
    %v119 = vadd.f32 %v38, %v118
    %v120 = vpop.f32.mrb[0].mxu0
    %121 = vmatprep.mubr.f32.mxu0 0.0
    %122 = vmatmul.mubr.f32.gmra.mrb[0].mxu0 %v50
    %v123 = vpop.f32.mrb[0].mxu0
    %v124 = vadd.f32 %v43, %v123
    %v125 = vpop.f32.mrb[0].mxu0
    %126 = vdwg.mxu0
    %v127 = vmax.f32 %v119, 0.0
    %v128 = vmax.f32 %v124, 0.0
    %s129 = scalar_lea.vmem %s1, 16
    %v130 = vld [vmem:[%s129] sm:$0xff]
    %v131 = vld [vmem:[%s129 + $0x8] sm:$0xff]
    %s132 = scalar_lea.vmem %s2, 16
    %v133 = vld [vmem:[%s132] sm:$0xff]
    %v134 = vld [vmem:[%s132 + $0x8] sm:$0xff]
    %136 = vset.pattern.permute.xlu0 0
    %137 = vperm.xlu0 %136, %v133
    %v138 = vpop.permute.xlu0 %137
    %141 = vset.pattern.permute.xlu0 0
    %142 = vperm.xlu0 %141, %v134
    %v143 = vpop.permute.xlu0 %142
    %v146 = vsel %vm45, %v130, 0
    %v149 = vsel %vm45, %v131, 0
    %151 = vmatprep.subr.mxu0 0.0
    %152 = vmatpush1.msra.mxu0 %v127
    %153 = vmatprep.subr.mxu0 0.0
    %154 = vmatpush1.msra.mxu0 %v128
    %155 = vmatprep.subr.mxu0 0.0
    %156 = vmatpush1.msra.mxu0 0.0
    %157 = vmatprep.subr.mxu0 0.0
    %158 = vmatpush1.msra.mxu0 0.0
    %159 = vmatprep.subr.mxu0 0.0
    %160 = vmatpush1.msra.mxu0 0.0
    %161 = vmatprep.subr.mxu0 0.0
    %162 = vmatpush1.msra.mxu0 0.0
    %163 = vmatprep.subr.mxu0 0.0
    %164 = vmatpush1.msra.mxu0 0.0
    %165 = vmatprep.subr.mxu0 0.0
    %166 = vmatpush1.msra.mxu0 0.0
    %167 = vmatprep.subr.mxu0 0.0
    %168 = vmatpush1.msra.mxu0 0.0
    %169 = vmatprep.subr.mxu0 0.0
    %170 = vmatpush1.msra.mxu0 0.0
    %171 = vmatprep.subr.mxu0 0.0
    %172 = vmatpush1.msra.mxu0 0.0
    %173 = vmatprep.subr.mxu0 0.0
    %174 = vmatpush1.msra.mxu0 0.0
    %175 = vmatprep.subr.mxu0 0.0
    %176 = vmatpush1.msra.mxu0 0.0
    %177 = vmatprep.subr.mxu0 0.0
    %178 = vmatpush1.msra.mxu0 0.0
    %179 = vmatprep.subr.mxu0 0.0
    %180 = vmatpush1.msra.mxu0 0.0
    %181 = vmatprep.subr.mxu0 0.0
    %182 = vmatpush1.msra.mxu0 0.0
    %183 = vmatprep.subr.mxu0 0.0
    %184 = vmatpush1.msra.mxu0 0.0
    %185 = vmatprep.subr.mxu0 0.0
    %186 = vmatpush1.msra.mxu0 0.0
    %187 = vmatprep.subr.mxu0 0.0
    %188 = vmatpush1.msra.mxu0 0.0
    %189 = vmatprep.subr.mxu0 0.0
    %190 = vmatpush1.msra.mxu0 0.0
    %191 = vmatprep.subr.mxu0 0.0
    %192 = vmatpush1.msra.mxu0 0.0
    %193 = vmatprep.subr.mxu0 0.0
    %194 = vmatpush1.msra.mxu0 0.0
    %195 = vmatprep.subr.mxu0 0.0
    %196 = vmatpush1.msra.mxu0 0.0
    %197 = vmatprep.subr.mxu0 0.0
    %198 = vmatpush1.msra.mxu0 0.0
    %199 = vmatprep.subr.mxu0 0.0
    %200 = vmatpush1.msra.mxu0 0.0
    %201 = vmatprep.subr.mxu0 0.0
    %202 = vmatpush1.msra.mxu0 0.0
    %203 = vmatprep.subr.mxu0 0.0
    %204 = vmatpush1.msra.mxu0 0.0
    %205 = vmatprep.subr.mxu0 0.0
    %206 = vmatpush1.msra.mxu0 0.0
    %207 = vmatprep.subr.mxu0 0.0
    %208 = vmatpush1.msra.mxu0 0.0
    %209 = vmatprep.subr.mxu0 0.0
    %210 = vmatpush1.msra.mxu0 0.0
    %211 = vmatprep.subr.mxu0 0.0
    %212 = vmatpush1.msra.mxu0 0.0
    %213 = vmatprep.subr.mxu0 0.0
    %214 = vmatpush1.msra.mxu0 0.0
    %215 = vmatprep.mubr.f32.mxu0 0.0
    %216 = vmatmul.mubr.f32.gmra.mrb[0].mxu0 %v146
    %v217 = vpop.f32.mrb[0].mxu0
    %v218 = vadd.f32 %v138, %v217
    %v219 = vpop.f32.mrb[0].mxu0
    %220 = vmatprep.mubr.f32.mxu0 0.0
    %221 = vmatmul.mubr.f32.gmra.mrb[0].mxu0 %v149
    %v222 = vpop.f32.mrb[0].mxu0
    %v223 = vadd.f32 %v143, %v222
    %v224 = vpop.f32.mrb[0].mxu0
    %225 = vdwg.mxu0
    %v226 = vmax.f32 %v218, 0.0
    %v227 = vmax.f32 %v223, 0.0
    %s228 = scalar_lea.vmem %s1, 32
    %v229 = vld [vmem:[%s228] sm:$0xff]
    %v230 = vld [vmem:[%s228 + $0x8] sm:$0xff]
    %s231 = scalar_lea.vmem %s2, 32
    %v232 = vld [vmem:[%s231] sm:$0xff]
    %v233 = vld [vmem:[%s231 + $0x8] sm:$0xff]
    %235 = vset.pattern.permute.xlu0 0
    %236 = vperm.xlu0 %235, %v232
    %v237 = vpop.permute.xlu0 %236
    %240 = vset.pattern.permute.xlu0 0
    %241 = vperm.xlu0 %240, %v233
    %v242 = vpop.permute.xlu0 %241
    %v244 = vsel %vm45, %v229, 0
    %v247 = vsel %vm45, %v230, 0
    %249 = vmatprep.subr.mxu0 0.0
    %250 = vmatpush1.msra.mxu0 %v226
    %251 = vmatprep.subr.mxu0 0.0
    %252 = vmatpush1.msra.mxu0 %v227
    %253 = vmatprep.subr.mxu0 0.0
    %254 = vmatpush1.msra.mxu0 0.0
    %255 = vmatprep.subr.mxu0 0.0
    %256 = vmatpush1.msra.mxu0 0.0
    %257 = vmatprep.subr.mxu0 0.0
    %258 = vmatpush1.msra.mxu0 0.0
    %259 = vmatprep.subr.mxu0 0.0
    %260 = vmatpush1.msra.mxu0 0.0
    %261 = vmatprep.subr.mxu0 0.0
    %262 = vmatpush1.msra.mxu0 0.0
    %263 = vmatprep.subr.mxu0 0.0
    %264 = vmatpush1.msra.mxu0 0.0
    %265 = vmatprep.subr.mxu0 0.0
    %266 = vmatpush1.msra.mxu0 0.0
    %267 = vmatprep.subr.mxu0 0.0
    %268 = vmatpush1.msra.mxu0 0.0
    %269 = vmatprep.subr.mxu0 0.0
    %270 = vmatpush1.msra.mxu0 0.0
    %271 = vmatprep.subr.mxu0 0.0
    %272 = vmatpush1.msra.mxu0 0.0
    %273 = vmatprep.subr.mxu0 0.0
    %274 = vmatpush1.msra.mxu0 0.0
    %275 = vmatprep.subr.mxu0 0.0
    %276 = vmatpush1.msra.mxu0 0.0
    %277 = vmatprep.subr.mxu0 0.0
    %278 = vmatpush1.msra.mxu0 0.0
    %279 = vmatprep.subr.mxu0 0.0
    %280 = vmatpush1.msra.mxu0 0.0
    %281 = vmatprep.subr.mxu0 0.0
    %282 = vmatpush1.msra.mxu0 0.0
    %283 = vmatprep.subr.mxu0 0.0
    %284 = vmatpush1.msra.mxu0 0.0
    %285 = vmatprep.subr.mxu0 0.0
    %286 = vmatpush1.msra.mxu0 0.0
    %287 = vmatprep.subr.mxu0 0.0
    %288 = vmatpush1.msra.mxu0 0.0
    %289 = vmatprep.subr.mxu0 0.0
    %290 = vmatpush1.msra.mxu0 0.0
    %291 = vmatprep.subr.mxu0 0.0
    %292 = vmatpush1.msra.mxu0 0.0
    %293 = vmatprep.subr.mxu0 0.0
    %294 = vmatpush1.msra.mxu0 0.0
    %295 = vmatprep.subr.mxu0 0.0
    %296 = vmatpush1.msra.mxu0 0.0
    %297 = vmatprep.subr.mxu0 0.0
    %298 = vmatpush1.msra.mxu0 0.0
    %299 = vmatprep.subr.mxu0 0.0
    %300 = vmatpush1.msra.mxu0 0.0
    %301 = vmatprep.subr.mxu0 0.0
    %302 = vmatpush1.msra.mxu0 0.0
    %303 = vmatprep.subr.mxu0 0.0
    %304 = vmatpush1.msra.mxu0 0.0
    %305 = vmatprep.subr.mxu0 0.0
    %306 = vmatpush1.msra.mxu0 0.0
    %307 = vmatprep.subr.mxu0 0.0
    %308 = vmatpush1.msra.mxu0 0.0
    %309 = vmatprep.subr.mxu0 0.0
    %310 = vmatpush1.msra.mxu0 0.0
    %311 = vmatprep.subr.mxu0 0.0
    %312 = vmatpush1.msra.mxu0 0.0
    %313 = vmatprep.mubr.f32.mxu0 0.0
    %314 = vmatmul.mubr.f32.gmra.mrb[0].mxu0 %v244
    %v315 = vpop.f32.mrb[0].mxu0
    %v316 = vadd.f32 %v237, %v315
    %v317 = vpop.f32.mrb[0].mxu0
    %318 = vmatprep.mubr.f32.mxu0 0.0
    %319 = vmatmul.mubr.f32.gmra.mrb[0].mxu0 %v247
    %v320 = vpop.f32.mrb[0].mxu0
    %v321 = vpop.f32.mrb[0].mxu0
    %322 = vdwg.mxu0
    %v323 = vmax.f32 %v316, 0.0
    %324 = vst [vmem:[#allocation5] sm:$0x7] %v323
    // Predicated region
    $region18: #{tpu_custom_call.1} parent=1 // pred_check
      _
    $region19: #{tpu_custom_call.1} parent=1 // pred_check_branch
      %326 = sbr.rel (0) target = $region21
    $region20: #{tpu_custom_call.1} parent=1 // pred_region
      %s328 = ssub.s32 64, 64
      %329 = vsyncadd [#allocation4], %s328
      %s331 = sshll.u32 [#allocation5], 4
      %s332 = int_to_ptr.vmem [resolvable:$true] %s331
      %334 = dma.vmem_to_hbm [thread:$0]  %s332, 64, %s3, [#allocation4]
    $region21: #{tpu_custom_call.1} parent=1 // pred_fallthru
      _
    // Predicated region
    $region22: #{tpu_custom_call.1} parent=1 // pred_check
      _
    $region23: #{tpu_custom_call.1} parent=1 // pred_check_branch
      %336 = sbr.rel (0) target = $region25
    $region24: #{tpu_custom_call.1} parent=1 // pred_region
      %337 = dma.done [#allocation4], 64
    $region25: #{tpu_custom_call.1} parent=1 // pred_fallthru
      _
    %338 = vsyncpa [#allocation3], 1
    %339 = vsyncpa [#allocation4], 1

</llo_original>
